<compile_context>
chip_gen: v7x
topology: tpu7x:2x2x1
jax: 0.10.0
libtpu: 0.0.40
codegen_flags: <defaults>
</compile_context>

<pallas_src>
import functools

import jax
import jax.numpy as jnp
from jax.experimental import pallas as pl
from jax.experimental.pallas import tpu as pltpu


def _layer_norm_kernel(x_ref, gamma_ref, beta_ref, o_ref, *, eps, reduce_len):
    # x_ref block: (tr, H, tw).  Normalize over H (axis -2, sublanes);
    # gamma/beta broadcast over the lane axis (last dim, indexed by w).
    x = x_ref[...].astype(jnp.float32)

    # Two-pass moments (exact; the fused sum/sumsq form loses precision and buys
    # nothing in an HBM-bound kernel).
    mean = jnp.mean(x, axis=-2, keepdims=True)
    d = x - mean
    # torch.std defaults to the unbiased estimator (Bessel correction, /(n-1)).
    # NOTE: reduce_len == 1 yields NaN, matching torch.std's behaviour.
    var = jnp.sum(d * d, axis=-2, keepdims=True) / float(reduce_len - 1)
    std = jnp.sqrt(var)

    # Exact reciprocal, computed only on the (tr, 1, tw) reduced tensor.
    inv = 1.0 / (std + eps)
    y = d * inv

    # gamma/beta arrive pre-cast to f32, shape (1, tw); broadcast over (tr, H, tw).
    y = y * gamma_ref[...] + beta_ref[...]
    o_ref[...] = y.astype(o_ref.dtype)


_MAX_LANE_TILE = 512  # lanes per W-tile when W is split (multiple of 128)


def _choose_tiles(nc, h, w, itemsize, target_bytes=4 * 1024 * 1024):
    """Pick (tr, tw): tr rows of the flattened (N*C) axis and tw lanes of W per block,
    budgeting the *padded f32* VMEM slab at ~target_bytes.  Partial last blocks are
    allowed on both axes (rows and lanes are independent)."""
    itemsize = max(itemsize, 4)                          # in-kernel working set is f32
    tw = w if w <= _MAX_LANE_TILE else _MAX_LANE_TILE    # multiple of 128 when split
    lanes = pl.cdiv(tw, 128) * 128                       # padded lane width
    subl = pl.cdiv(h, 8) * 8                             # padded sublane height
    row_bytes = subl * lanes * itemsize                  # one (1, H, tw) row, padded
    # TODO(synk): if a single padded row exceeds the budget (huge H with small W), the
    # reduction axis itself would need a grid split + accumulator; not needed here.
    tr = int(max(1, min(nc, target_bytes // row_bytes)))

    # v7x nicety: prefer an even number of parallel grid steps so neither TensorCore
    # idles (best effort; perf-only).
    row_tiles = pl.cdiv(nc, tr)
    w_tiles = pl.cdiv(w, tw)
    if row_tiles > 1 and (row_tiles * w_tiles) % 2 == 1:
        tr = int(pl.cdiv(nc, row_tiles + 1))
    return tr, tw


def layer_normalization(x, gamma=None, beta=None, *, eps=1e-5, affine=True):
    """x: NCHW.  Per-(n, c, w) normalization over H; affine broadcasts (num_features,)
    over the last dim W (PyTorch broadcasting rules => num_features must equal W)."""
    N, C, H, W = x.shape
    NC = N * C

    # Free relayout: contiguous reshape only — no transpose, no extra HBM pass.
    xr = x.reshape(NC, H, W)

    if affine and gamma is not None:
        assert gamma.shape[-1] == W and beta.shape[-1] == W, (
            "PyTorch affine broadcasts (num_features,) against the last dim W; "
            "num_features must equal W.")
        g = gamma.astype(jnp.float32).reshape(1, W)
        b = beta.astype(jnp.float32).reshape(1, W)
    else:
        g = jnp.ones((1, W), dtype=jnp.float32)
        b = jnp.zeros((1, W), dtype=jnp.float32)

    tr, tw = _choose_tiles(NC, H, W, x.dtype.itemsize)
    grid = (pl.cdiv(NC, tr), pl.cdiv(W, tw))

    kernel = functools.partial(_layer_norm_kernel, eps=eps, reduce_len=H)
    out = pl.pallas_call(
        kernel,
        out_shape=jax.ShapeDtypeStruct((NC, H, W), x.dtype),
        grid=grid,
        in_specs=[
            pl.BlockSpec((tr, H, tw), lambda i, j: (i, 0, j)),
            pl.BlockSpec((1, tw), lambda i, j: (0, j)),   # gamma: tiny, resident
            pl.BlockSpec((1, tw), lambda i, j: (0, j)),   # beta
        ],
        out_specs=pl.BlockSpec((tr, H, tw), lambda i, j: (i, 0, j)),
        compiler_params=pltpu.CompilerParams(
            dimension_semantics=("parallel", "parallel"),
            # Explicit on purpose: v5e's default scoped limit is only 16 MiB.
            # ~4 MiB blocks double-buffered (in + out) plus f32 temporaries stay
            # well inside 32 MiB on every generation (v7x physical VMEM is 64 MiB).
            vmem_limit_bytes=32 * 1024 * 1024,
        ),
    )(xr, g, b)

    # Free contiguous reshape back to NCHW.
    return out.reshape(N, C, H, W)


def _reference(x, gamma, beta, eps=1e-5):
    # Pure-JAX transliteration of the PyTorch forward (correctness check).
    xt = jnp.swapaxes(x, -1, -2)
    mean = jnp.mean(xt, axis=-1, keepdims=True)
    std = jnp.std(xt, axis=-1, keepdims=True, ddof=1)
    xt = (xt - mean) / (std + eps)
    xn = jnp.swapaxes(xt, -1, -2)
    return xn * gamma + beta


if __name__ == "__main__":
    # NOTE: the PyTorch module's affine step broadcasts gamma (num_features,) against
    # the LAST dim of an NCHW tensor, so it is only valid when num_features == W.
    N, C, H, W = 2, 4, 16, 16
    num_features = 16  # = W
    eps = 1e-5

    key = jax.random.PRNGKey(0)
    kx, kg, kb = jax.random.split(key, 3)
    x = jax.random.normal(kx, (N, C, H, W), dtype=jnp.float32)
    # Deterministic, non-trivial parameter init so the affine path is exercised.
    gamma = 1.0 + 0.1 * jax.random.normal(kg, (num_features,), dtype=jnp.float32)
    beta = 0.1 * jax.random.normal(kb, (num_features,), dtype=jnp.float32)

    out = layer_normalization(x, gamma, beta, eps=eps, affine=True)
    out = jax.block_until_ready(out)

    ref = _reference(x, gamma, beta, eps=eps)
    assert out.shape == x.shape and out.dtype == x.dtype
    # Exact math restored (two-pass variance, exact reciprocal) -> tight tolerance.
    assert jnp.allclose(out, ref, atol=1e-5, rtol=1e-5), "mismatch vs reference"
    print("KERNEL_OK")
</pallas_src>

<mosaic_0001>
module attributes {stable_mosaic.version = 11 : i64} {
  func.func @_layer_norm_kernel(%arg0: i32, %arg1: i32, %arg2: memref<8x16x16xf32, #tpu.memory_space<vmem>>, %arg3: memref<1x16xf32, #tpu.memory_space<vmem>>, %arg4: memref<1x16xf32, #tpu.memory_space<vmem>>, %arg5: memref<8x16x16xf32, #tpu.memory_space<vmem>>) attributes {dimension_semantics = [#tpu.dimension_semantics<parallel>, #tpu.dimension_semantics<parallel>], iteration_bounds = array<i64: 1, 1>, scalar_prefetch = 0 : i64, scratch_operands = 0 : i64, tpu.core_type = #tpu.core_type<tc>, window_params = [{transform_indices = @transform_0, window_bounds = array<i64: 8, 16, 16>}, {transform_indices = @transform_1, window_bounds = array<i64: 1, 16>}, {transform_indices = @transform_2, window_bounds = array<i64: 1, 16>}, {transform_indices = @transform_3, window_bounds = array<i64: 8, 16, 16>}]} {
    %c0 = arith.constant 0 : index
    %c0_0 = arith.constant 0 : index
    %c0_1 = arith.constant 0 : index
    %0 = vector.load %arg2[%c0, %c0_0, %c0_1] : memref<8x16x16xf32, #tpu.memory_space<vmem>>, vector<8x16x16xf32>
    %cst = arith.constant dense<0.000000e+00> : vector<8x16xf32>
    %1 = vector.multi_reduction <add>, %0, %cst [1] : vector<8x16x16xf32> to vector<8x16xf32>
    %2 = vector.shape_cast %1 : vector<8x16xf32> to vector<8x1x16xf32>
    %cst_2 = arith.constant 1.600000e+01 : f32
    %3 = vector.broadcast %cst_2 : f32 to vector<8x1x16xf32>
    %4 = arith.divf %2, %3 : vector<8x1x16xf32>
    %5 = vector.broadcast %4 : vector<8x1x16xf32> to vector<8x16x16xf32>
    %6 = arith.subf %0, %5 : vector<8x16x16xf32>
    %7 = arith.mulf %6, %6 : vector<8x16x16xf32>
    %cst_3 = arith.constant dense<0.000000e+00> : vector<8x16xf32>
    %8 = vector.multi_reduction <add>, %7, %cst_3 [1] : vector<8x16x16xf32> to vector<8x16xf32>
    %9 = vector.shape_cast %8 : vector<8x16xf32> to vector<8x1x16xf32>
    %cst_4 = arith.constant 1.500000e+01 : f32
    %10 = vector.broadcast %cst_4 : f32 to vector<8x1x16xf32>
    %11 = arith.divf %9, %10 : vector<8x1x16xf32>
    %12 = math.sqrt %11 : vector<8x1x16xf32>
    %cst_5 = arith.constant 9.99999974E-6 : f32
    %13 = vector.broadcast %cst_5 : f32 to vector<8x1x16xf32>
    %14 = arith.addf %12, %13 : vector<8x1x16xf32>
    %cst_6 = arith.constant 1.000000e+00 : f32
    %15 = vector.broadcast %cst_6 : f32 to vector<8x1x16xf32>
    %16 = arith.divf %15, %14 : vector<8x1x16xf32>
    %17 = vector.broadcast %16 : vector<8x1x16xf32> to vector<8x16x16xf32>
    %18 = arith.mulf %6, %17 : vector<8x16x16xf32>
    %c0_7 = arith.constant 0 : index
    %c0_8 = arith.constant 0 : index
    %19 = vector.load %arg3[%c0_7, %c0_8] : memref<1x16xf32, #tpu.memory_space<vmem>>, vector<1x16xf32>
    %20 = vector.shape_cast %19 : vector<1x16xf32> to vector<1x1x16xf32>
    %21 = vector.broadcast %20 : vector<1x1x16xf32> to vector<8x16x16xf32>
    %22 = arith.mulf %18, %21 : vector<8x16x16xf32>
    %c0_9 = arith.constant 0 : index
    %c0_10 = arith.constant 0 : index
    %23 = vector.load %arg4[%c0_9, %c0_10] : memref<1x16xf32, #tpu.memory_space<vmem>>, vector<1x16xf32>
    %24 = vector.shape_cast %23 : vector<1x16xf32> to vector<1x1x16xf32>
    %25 = vector.broadcast %24 : vector<1x1x16xf32> to vector<8x16x16xf32>
    %26 = arith.addf %22, %25 : vector<8x16x16xf32>
    %c0_11 = arith.constant 0 : index
    %c0_12 = arith.constant 0 : index
    %c0_13 = arith.constant 0 : index
    %27 = vector.load %arg5[%c0_11, %c0_12, %c0_13] : memref<8x16x16xf32, #tpu.memory_space<vmem>>, vector<8x16x16xf32>
    tpu.vector_store %arg5[%c0_11, %c0_12, %c0_13], %26 {strides = array<i32>} : memref<8x16x16xf32, #tpu.memory_space<vmem>>, vector<8x16x16xf32>,
    return
  }
  func.func @transform_0(%arg0: i32, %arg1: i32) -> (i32, i32, i32) {
    %c0_i32 = arith.constant 0 : i32
    %c0_i32_0 = arith.constant 0 : i32
    return %arg0, %c0_i32, %arg1 : i32, i32, i32
  }
  func.func @transform_1(%arg0: i32, %arg1: i32) -> (i32, i32) {
    %c0_i32 = arith.constant 0 : i32
    %c0_i32_0 = arith.constant 0 : i32
    return %c0_i32, %arg1 : i32, i32
  }
  func.func @transform_2(%arg0: i32, %arg1: i32) -> (i32, i32) {
    %c0_i32 = arith.constant 0 : i32
    %c0_i32_0 = arith.constant 0 : i32
    return %c0_i32, %arg1 : i32, i32
  }
  func.func @transform_3(%arg0: i32, %arg1: i32) -> (i32, i32, i32) {
    %c0_i32 = arith.constant 0 : i32
    %c0_i32_0 = arith.constant 0 : i32
    return %arg0, %c0_i32, %arg1 : i32, i32, i32
  }
}

</mosaic_0001>

<llo_original>
// kernel: tpu_custom_call.1
$region0: #{tpu_custom_call.1}
  #allocation0 [shape = 'u32[]', space=smem, size = 0x4, offset = 0x4, fixed_abs, tag = 'smem constant byte address 0x4 - core index']
  #allocation1 [shape = 'u32[144,128]{1,0:T(1,128)}', space=vmem, size = 0x12000, scoped, tag = 'internal scratch']
  %s0 = inlined_call_operand.hbm [shape: f32[8,16,16], index: 0, kind: input, shape index: {}]
  %s1 = inlined_call_operand.vmem [shape: f32[1,16], index: 1, kind: input, shape index: {}]
  %s2 = inlined_call_operand.vmem [shape: f32[1,16], index: 2, kind: input, shape index: {}]
  %s3 = inlined_call_operand.hbm [shape: f32[8,16,16], index: 3, kind: output, shape index: {}]
  %s4 = sld [smem:[#allocation0]]
  $region26: #{tpu_custom_call.1} parent=0
    _
  %s6 = ssub.s32 1, %s4
  %s7 = scalar_select 0, %s6, %s4
  $region1: #{tpu_custom_call.1} parent=0
    #allocation2 [shape = 'u8[65536]{0}', space=vmem, size = 0x10000, scoped, tag = 'input window, operand 0, single buffered']
    #allocation3 [shape = 's32[1]{0}', space=sflag, size = 0x4, scoped, tag = 'scoped memory for tpu_custom_call.1']
    #allocation4 [shape = 's32[1]{0}', space=sflag, size = 0x4, scoped, tag = 'scoped memory for tpu_custom_call.1']
    #allocation5 [shape = 'u8[65536]{0}', space=vmem, size = 0x10000, scoped, tag = 'output window, operand 0, single buffered']
    %8 = vsyncpa [#allocation3], 0
    %9 = vsyncpa [#allocation4], 0
    // Predicated region
    $region2: #{tpu_custom_call.1} parent=1 // pred_check
      _
    $region3: #{tpu_custom_call.1} parent=1 // pred_check_branch
      %11 = sbr.rel (0) target = $region5
    $region4: #{tpu_custom_call.1} parent=1 // pred_region
      %s13 = ssub.s32 2048, 2048
      %14 = vsyncadd [#allocation3], %s13
      %s15 = sshll.u32 [#allocation2], 4
      %s16 = int_to_ptr.vmem [resolvable:$true] %s15
      %21 = dma.hbm_to_vmem [thread:$0]  %s0, 2048, %s16, [#allocation3], 128, 128, 8
    $region5: #{tpu_custom_call.1} parent=1 // pred_fallthru
      _
    // Predicated region
    $region6: #{tpu_custom_call.1} parent=1 // pred_check
      _
    $region7: #{tpu_custom_call.1} parent=1 // pred_check_branch
      %23 = sbr.rel (0) target = $region9
    $region8: #{tpu_custom_call.1} parent=1 // pred_region
      _
    $region9: #{tpu_custom_call.1} parent=1 // pred_fallthru
      _
    // Predicated region
    $region10: #{tpu_custom_call.1} parent=1 // pred_check
      _
    $region11: #{tpu_custom_call.1} parent=1 // pred_check_branch
      %25 = sbr.rel (0) target = $region13
    $region12: #{tpu_custom_call.1} parent=1 // pred_region
      _
    $region13: #{tpu_custom_call.1} parent=1 // pred_fallthru
      _
    // Predicated region
    $region14: #{tpu_custom_call.1} parent=1 // pred_check
      _
    $region15: #{tpu_custom_call.1} parent=1 // pred_check_branch
      %27 = sbr.rel (0) target = $region17
    $region16: #{tpu_custom_call.1} parent=1 // pred_region
      %28 = dma.done [#allocation3], 2048
    $region17: #{tpu_custom_call.1} parent=1 // pred_fallthru
      _
    %v29 = vld [vmem:[#allocation2] sm:$0xff]
    %v30 = vld [vmem:[#allocation2 + $0x8] sm:$0xff]
    %v31 = vld [vmem:[#allocation2 + $0x10] sm:$0xff]
    %v32 = vld [vmem:[#allocation2 + $0x18] sm:$0xff]
    %v33 = vld [vmem:[#allocation2 + $0x20] sm:$0xff]
    %v34 = vld [vmem:[#allocation2 + $0x28] sm:$0xff]
    %v35 = vld [vmem:[#allocation2 + $0x30] sm:$0xff]
    %v36 = vld [vmem:[#allocation2 + $0x38] sm:$0xff]
    %v37 = vld [vmem:[#allocation2 + $0x40] sm:$0xff]
    %v38 = vld [vmem:[#allocation2 + $0x48] sm:$0xff]
    %v39 = vld [vmem:[#allocation2 + $0x50] sm:$0xff]
    %v40 = vld [vmem:[#allocation2 + $0x58] sm:$0xff]
    %v41 = vld [vmem:[#allocation2 + $0x60] sm:$0xff]
    %v42 = vld [vmem:[#allocation2 + $0x68] sm:$0xff]
    %v43 = vld [vmem:[#allocation2 + $0x70] sm:$0xff]
    %v44 = vld [vmem:[#allocation2 + $0x78] sm:$0xff]
    %vm45 = vcmask 130048
    %v46 = vsel %vm45, %v29, 0.0
    %v47 = vsel %vm45, %v30, 0.0
    %v48 = vadd.f32 %v46, %v47
    %v49 = vrot.slane %v48, 4
    %v50 = vadd.f32 %v48, %v49
    %v51 = vrot.slane %v50, 2
    %v52 = vadd.f32 %v50, %v51
    %v53 = vrot.slane %v52, 1
    %v54 = vadd.f32 %v52, %v53
    %v55 = vsel %vm45, %v31, 0.0
    %v56 = vsel %vm45, %v32, 0.0
    %v57 = vadd.f32 %v55, %v56
    %v58 = vrot.slane %v57, 4
    %v59 = vadd.f32 %v57, %v58
    %v60 = vrot.slane %v59, 2
    %v61 = vadd.f32 %v59, %v60
    %v62 = vrot.slane %v61, 1
    %v63 = vadd.f32 %v61, %v62
    %v64 = vsel %vm45, %v33, 0.0
    %v65 = vsel %vm45, %v34, 0.0
    %v66 = vadd.f32 %v64, %v65
    %v67 = vrot.slane %v66, 4
    %v68 = vadd.f32 %v66, %v67
    %v69 = vrot.slane %v68, 2
    %v70 = vadd.f32 %v68, %v69
    %v71 = vrot.slane %v70, 1
    %v72 = vadd.f32 %v70, %v71
    %v73 = vsel %vm45, %v35, 0.0
    %v74 = vsel %vm45, %v36, 0.0
    %v75 = vadd.f32 %v73, %v74
    %v76 = vrot.slane %v75, 4
    %v77 = vadd.f32 %v75, %v76
    %v78 = vrot.slane %v77, 2
    %v79 = vadd.f32 %v77, %v78
    %v80 = vrot.slane %v79, 1
    %v81 = vadd.f32 %v79, %v80
    %v82 = vsel %vm45, %v37, 0.0
    %v83 = vsel %vm45, %v38, 0.0
    %v84 = vadd.f32 %v82, %v83
    %v85 = vrot.slane %v84, 4
    %v86 = vadd.f32 %v84, %v85
    %v87 = vrot.slane %v86, 2
    %v88 = vadd.f32 %v86, %v87
    %v89 = vrot.slane %v88, 1
    %v90 = vadd.f32 %v88, %v89
    %v91 = vsel %vm45, %v39, 0.0
    %v92 = vsel %vm45, %v40, 0.0
    %v93 = vadd.f32 %v91, %v92
    %v94 = vrot.slane %v93, 4
    %v95 = vadd.f32 %v93, %v94
    %v96 = vrot.slane %v95, 2
    %v97 = vadd.f32 %v95, %v96
    %v98 = vrot.slane %v97, 1
    %v99 = vadd.f32 %v97, %v98
    %v100 = vsel %vm45, %v41, 0.0
    %v101 = vsel %vm45, %v42, 0.0
    %v102 = vadd.f32 %v100, %v101
    %v103 = vrot.slane %v102, 4
    %v104 = vadd.f32 %v102, %v103
    %v105 = vrot.slane %v104, 2
    %v106 = vadd.f32 %v104, %v105
    %v107 = vrot.slane %v106, 1
    %v108 = vadd.f32 %v106, %v107
    %v109 = vsel %vm45, %v43, 0.0
    %v110 = vsel %vm45, %v44, 0.0
    %v111 = vadd.f32 %v109, %v110
    %v112 = vrot.slane %v111, 4
    %v113 = vadd.f32 %v111, %v112
    %v114 = vrot.slane %v113, 2
    %v115 = vadd.f32 %v113, %v114
    %v116 = vrot.slane %v115, 1
    %v117 = vadd.f32 %v115, %v116
    %v118 = vrcp.pop 16.0
    %v119 = vmul.f32 %v54, %v118
    %v120 = vmul.f32 %v63, %v118
    %v121 = vmul.f32 %v72, %v118
    %v122 = vmul.f32 %v81, %v118
    %v123 = vmul.f32 %v90, %v118
    %v124 = vmul.f32 %v99, %v118
    %v125 = vmul.f32 %v108, %v118
    %v126 = vmul.f32 %v117, %v118
    %v127 = vsub.f32 %v29, %v119
    %v128 = vsub.f32 %v30, %v119
    %v129 = vsub.f32 %v31, %v120
    %v130 = vsub.f32 %v32, %v120
    %v131 = vsub.f32 %v33, %v121
    %v132 = vsub.f32 %v34, %v121
    %v133 = vsub.f32 %v35, %v122
    %v134 = vsub.f32 %v36, %v122
    %v135 = vsub.f32 %v37, %v123
    %v136 = vsub.f32 %v38, %v123
    %v137 = vsub.f32 %v39, %v124
    %v138 = vsub.f32 %v40, %v124
    %v139 = vsub.f32 %v41, %v125
    %v140 = vsub.f32 %v42, %v125
    %v141 = vsub.f32 %v43, %v126
    %v142 = vsub.f32 %v44, %v126
    %v143 = vmul.f32 %v127, %v127
    %v144 = vmul.f32 %v128, %v128
    %v145 = vmul.f32 %v129, %v129
    %v146 = vmul.f32 %v130, %v130
    %v147 = vmul.f32 %v131, %v131
    %v148 = vmul.f32 %v132, %v132
    %v149 = vmul.f32 %v133, %v133
    %v150 = vmul.f32 %v134, %v134
    %v151 = vmul.f32 %v135, %v135
    %v152 = vmul.f32 %v136, %v136
    %v153 = vmul.f32 %v137, %v137
    %v154 = vmul.f32 %v138, %v138
    %v155 = vmul.f32 %v139, %v139
    %v156 = vmul.f32 %v140, %v140
    %v157 = vmul.f32 %v141, %v141
    %v158 = vmul.f32 %v142, %v142
    %v159 = vsel %vm45, %v143, 0.0
    %v160 = vsel %vm45, %v144, 0.0
    %v161 = vadd.f32 %v159, %v160
    %v162 = vrot.slane %v161, 4
    %v163 = vadd.f32 %v161, %v162
    %v164 = vrot.slane %v163, 2
    %v165 = vadd.f32 %v163, %v164
    %v166 = vrot.slane %v165, 1
    %v167 = vadd.f32 %v165, %v166
    %v168 = vsel %vm45, %v145, 0.0
    %v169 = vsel %vm45, %v146, 0.0
    %v170 = vadd.f32 %v168, %v169
    %v171 = vrot.slane %v170, 4
    %v172 = vadd.f32 %v170, %v171
    %v173 = vrot.slane %v172, 2
    %v174 = vadd.f32 %v172, %v173
    %v175 = vrot.slane %v174, 1
    %v176 = vadd.f32 %v174, %v175
    %v177 = vsel %vm45, %v147, 0.0
    %v178 = vsel %vm45, %v148, 0.0
    %v179 = vadd.f32 %v177, %v178
    %v180 = vrot.slane %v179, 4
    %v181 = vadd.f32 %v179, %v180
    %v182 = vrot.slane %v181, 2
    %v183 = vadd.f32 %v181, %v182
    %v184 = vrot.slane %v183, 1
    %v185 = vadd.f32 %v183, %v184
    %v186 = vsel %vm45, %v149, 0.0
    %v187 = vsel %vm45, %v150, 0.0
    %v188 = vadd.f32 %v186, %v187
    %v189 = vrot.slane %v188, 4
    %v190 = vadd.f32 %v188, %v189
    %v191 = vrot.slane %v190, 2
    %v192 = vadd.f32 %v190, %v191
    %v193 = vrot.slane %v192, 1
    %v194 = vadd.f32 %v192, %v193
    %v195 = vsel %vm45, %v151, 0.0
    %v196 = vsel %vm45, %v152, 0.0
    %v197 = vadd.f32 %v195, %v196
    %v198 = vrot.slane %v197, 4
    %v199 = vadd.f32 %v197, %v198
    %v200 = vrot.slane %v199, 2
    %v201 = vadd.f32 %v199, %v200
    %v202 = vrot.slane %v201, 1
    %v203 = vadd.f32 %v201, %v202
    %v204 = vsel %vm45, %v153, 0.0
    %v205 = vsel %vm45, %v154, 0.0
    %v206 = vadd.f32 %v204, %v205
    %v207 = vrot.slane %v206, 4
    %v208 = vadd.f32 %v206, %v207
    %v209 = vrot.slane %v208, 2
    %v210 = vadd.f32 %v208, %v209
    %v211 = vrot.slane %v210, 1
    %v212 = vadd.f32 %v210, %v211
    %v213 = vsel %vm45, %v155, 0.0
    %v214 = vsel %vm45, %v156, 0.0
    %v215 = vadd.f32 %v213, %v214
    %v216 = vrot.slane %v215, 4
    %v217 = vadd.f32 %v215, %v216
    %v218 = vrot.slane %v217, 2
    %v219 = vadd.f32 %v217, %v218
    %v220 = vrot.slane %v219, 1
    %v221 = vadd.f32 %v219, %v220
    %v222 = vsel %vm45, %v157, 0.0
    %v223 = vsel %vm45, %v158, 0.0
    %v224 = vadd.f32 %v222, %v223
    %v225 = vrot.slane %v224, 4
    %v226 = vadd.f32 %v224, %v225
    %v227 = vrot.slane %v226, 2
    %v228 = vadd.f32 %v226, %v227
    %v229 = vrot.slane %v228, 1
    %v230 = vadd.f32 %v228, %v229
    %v231 = vrcp.pop 15.0
    %v232 = vmul.f32 %v167, %v231
    %v233 = vmul.f32 %v176, %v231
    %v234 = vmul.f32 %v185, %v231
    %v235 = vmul.f32 %v194, %v231
    %v236 = vmul.f32 %v203, %v231
    %v237 = vmul.f32 %v212, %v231
    %v238 = vmul.f32 %v221, %v231
    %v239 = vmul.f32 %v230, %v231
    %v240 = vrsqrt.pop %v232
    %v241 = vmul.f32 %v232, %v240
    %vm242 = vcmp.eq.f32.partialorder %v232, inf
    %v243 = vsel %vm242, %v232, %v241
    %vm244 = vcmp.eq.f32.partialorder %v232, 0.0
    %v245 = vand.u32 %v232, 2147483648
    %v246 = vsel %vm244, %v245, %v243
    %v247 = vrsqrt.pop %v233
    %v248 = vmul.f32 %v233, %v247
    %vm249 = vcmp.eq.f32.partialorder %v233, inf
    %v250 = vsel %vm249, %v233, %v248
    %vm251 = vcmp.eq.f32.partialorder %v233, 0.0
    %v252 = vand.u32 %v233, 2147483648
    %v253 = vsel %vm251, %v252, %v250
    %v254 = vrsqrt.pop %v234
    %v255 = vmul.f32 %v234, %v254
    %vm256 = vcmp.eq.f32.partialorder %v234, inf
    %v257 = vsel %vm256, %v234, %v255
    %vm258 = vcmp.eq.f32.partialorder %v234, 0.0
    %v259 = vand.u32 %v234, 2147483648
    %v260 = vsel %vm258, %v259, %v257
    %v261 = vrsqrt.pop %v235
    %v262 = vmul.f32 %v235, %v261
    %vm263 = vcmp.eq.f32.partialorder %v235, inf
    %v264 = vsel %vm263, %v235, %v262
    %vm265 = vcmp.eq.f32.partialorder %v235, 0.0
    %v266 = vand.u32 %v235, 2147483648
    %v267 = vsel %vm265, %v266, %v264
    %v268 = vrsqrt.pop %v236
    %v269 = vmul.f32 %v236, %v268
    %vm270 = vcmp.eq.f32.partialorder %v236, inf
    %v271 = vsel %vm270, %v236, %v269
    %vm272 = vcmp.eq.f32.partialorder %v236, 0.0
    %v273 = vand.u32 %v236, 2147483648
    %v274 = vsel %vm272, %v273, %v271
    %v275 = vrsqrt.pop %v237
    %v276 = vmul.f32 %v237, %v275
    %vm277 = vcmp.eq.f32.partialorder %v237, inf
    %v278 = vsel %vm277, %v237, %v276
    %vm279 = vcmp.eq.f32.partialorder %v237, 0.0
    %v280 = vand.u32 %v237, 2147483648
    %v281 = vsel %vm279, %v280, %v278
    %v282 = vrsqrt.pop %v238
    %v283 = vmul.f32 %v238, %v282
    %vm284 = vcmp.eq.f32.partialorder %v238, inf
    %v285 = vsel %vm284, %v238, %v283
    %vm286 = vcmp.eq.f32.partialorder %v238, 0.0
    %v287 = vand.u32 %v238, 2147483648
    %v288 = vsel %vm286, %v287, %v285
    %v289 = vrsqrt.pop %v239
    %v290 = vmul.f32 %v239, %v289
    %vm291 = vcmp.eq.f32.partialorder %v239, inf
    %v292 = vsel %vm291, %v239, %v290
    %vm293 = vcmp.eq.f32.partialorder %v239, 0.0
    %v294 = vand.u32 %v239, 2147483648
    %v295 = vsel %vm293, %v294, %v292
    %v296 = vadd.f32 %v246, 1e-05
    %v297 = vadd.f32 %v253, 1e-05
    %v298 = vadd.f32 %v260, 1e-05
    %v299 = vadd.f32 %v267, 1e-05
    %v300 = vadd.f32 %v274, 1e-05
    %v301 = vadd.f32 %v281, 1e-05
    %v302 = vadd.f32 %v288, 1e-05
    %v303 = vadd.f32 %v295, 1e-05
    %v304 = vrcp.pop %v296
    %v305 = vmul.f32 1.0, %v304
    %v306 = vrcp.pop %v297
    %v307 = vmul.f32 1.0, %v306
    %v308 = vrcp.pop %v298
    %v309 = vmul.f32 1.0, %v308
    %v310 = vrcp.pop %v299
    %v311 = vmul.f32 1.0, %v310
    %v312 = vrcp.pop %v300
    %v313 = vmul.f32 1.0, %v312
    %v314 = vrcp.pop %v301
    %v315 = vmul.f32 1.0, %v314
    %v316 = vrcp.pop %v302
    %v317 = vmul.f32 1.0, %v316
    %v318 = vrcp.pop %v303
    %v319 = vmul.f32 1.0, %v318
    %v320 = vmul.f32 %v127, %v305
    %v321 = vmul.f32 %v128, %v305
    %v322 = vmul.f32 %v129, %v307
    %v323 = vmul.f32 %v130, %v307
    %v324 = vmul.f32 %v131, %v309
    %v325 = vmul.f32 %v132, %v309
    %v326 = vmul.f32 %v133, %v311
    %v327 = vmul.f32 %v134, %v311
    %v328 = vmul.f32 %v135, %v313
    %v329 = vmul.f32 %v136, %v313
    %v330 = vmul.f32 %v137, %v315
    %v331 = vmul.f32 %v138, %v315
    %v332 = vmul.f32 %v139, %v317
    %v333 = vmul.f32 %v140, %v317
    %v334 = vmul.f32 %v141, %v319
    %v335 = vmul.f32 %v142, %v319
    %v336 = vld [vmem:[%s1] sm:$0x1]
    %v338 = vlaneseq
    %v339 = vshrl.u32 %v338, 7
    %v340 = vsub.s32 0, %v339
    %v341 = vrot.slane %v336, %v340
    %v343 = vmul.f32 %v320, %v341
    %v344 = vmul.f32 %v321, %v341
    %v345 = vmul.f32 %v322, %v341
    %v346 = vmul.f32 %v323, %v341
    %v347 = vmul.f32 %v324, %v341
    %v348 = vmul.f32 %v325, %v341
    %v349 = vmul.f32 %v326, %v341
    %v350 = vmul.f32 %v327, %v341
    %v351 = vmul.f32 %v328, %v341
    %v352 = vmul.f32 %v329, %v341
    %v353 = vmul.f32 %v330, %v341
    %v354 = vmul.f32 %v331, %v341
    %v355 = vmul.f32 %v332, %v341
    %v356 = vmul.f32 %v333, %v341
    %v357 = vmul.f32 %v334, %v341
    %v358 = vmul.f32 %v335, %v341
    %v359 = vld [vmem:[%s2] sm:$0x1]
    %v361 = vlaneseq
    %v362 = vshrl.u32 %v361, 7
    %v363 = vsub.s32 0, %v362
    %v364 = vrot.slane %v359, %v363
    %v366 = vadd.f32 %v343, %v364
    %v367 = vadd.f32 %v344, %v364
    %v368 = vadd.f32 %v345, %v364
    %v369 = vadd.f32 %v346, %v364
    %v370 = vadd.f32 %v347, %v364
    %v371 = vadd.f32 %v348, %v364
    %v372 = vadd.f32 %v349, %v364
    %v373 = vadd.f32 %v350, %v364
    %v374 = vadd.f32 %v351, %v364
    %v375 = vadd.f32 %v352, %v364
    %v376 = vadd.f32 %v353, %v364
    %v377 = vadd.f32 %v354, %v364
    %v378 = vadd.f32 %v355, %v364
    %v379 = vadd.f32 %v356, %v364
    %v380 = vadd.f32 %v357, %v364
    %v381 = vadd.f32 %v358, %v364
    %382 = vst.msk [vmem:[#allocation5] sm:$0xff] %vm45, %v366
    %383 = vst.msk [vmem:[#allocation5 + $0x8] sm:$0xff] %vm45, %v367
    %384 = vst.msk [vmem:[#allocation5 + $0x10] sm:$0xff] %vm45, %v368
    %385 = vst.msk [vmem:[#allocation5 + $0x18] sm:$0xff] %vm45, %v369
    %386 = vst.msk [vmem:[#allocation5 + $0x20] sm:$0xff] %vm45, %v370
    %387 = vst.msk [vmem:[#allocation5 + $0x28] sm:$0xff] %vm45, %v371
    %388 = vst.msk [vmem:[#allocation5 + $0x30] sm:$0xff] %vm45, %v372
    %389 = vst.msk [vmem:[#allocation5 + $0x38] sm:$0xff] %vm45, %v373
    %390 = vst.msk [vmem:[#allocation5 + $0x40] sm:$0xff] %vm45, %v374
    %391 = vst.msk [vmem:[#allocation5 + $0x48] sm:$0xff] %vm45, %v375
    %392 = vst.msk [vmem:[#allocation5 + $0x50] sm:$0xff] %vm45, %v376
    %393 = vst.msk [vmem:[#allocation5 + $0x58] sm:$0xff] %vm45, %v377
    %394 = vst.msk [vmem:[#allocation5 + $0x60] sm:$0xff] %vm45, %v378
    %395 = vst.msk [vmem:[#allocation5 + $0x68] sm:$0xff] %vm45, %v379
    %396 = vst.msk [vmem:[#allocation5 + $0x70] sm:$0xff] %vm45, %v380
    %397 = vst.msk [vmem:[#allocation5 + $0x78] sm:$0xff] %vm45, %v381
    // Predicated region
    $region18: #{tpu_custom_call.1} parent=1 // pred_check
      _
    $region19: #{tpu_custom_call.1} parent=1 // pred_check_branch
      %399 = sbr.rel (0) target = $region21
    $region20: #{tpu_custom_call.1} parent=1 // pred_region
      %s401 = ssub.s32 2048, 2048
      %402 = vsyncadd [#allocation4], %s401
      %s403 = sshll.u32 [#allocation5], 4
      %s404 = int_to_ptr.vmem [resolvable:$true] %s403
      %409 = dma.vmem_to_hbm [thread:$0]  %s404, 2048, %s3, [#allocation4], 128, 128, 8
    $region21: #{tpu_custom_call.1} parent=1 // pred_fallthru
      _
    // Predicated region
    $region22: #{tpu_custom_call.1} parent=1 // pred_check
      _
    $region23: #{tpu_custom_call.1} parent=1 // pred_check_branch
      %411 = sbr.rel (0) target = $region25
    $region24: #{tpu_custom_call.1} parent=1 // pred_region
      %412 = dma.done [#allocation4], 2048
    $region25: #{tpu_custom_call.1} parent=1 // pred_fallthru
      _
    %413 = vsyncpa [#allocation3], 1
    %414 = vsyncpa [#allocation4], 1

</llo_original>
